<compile_context>
chip_gen: v5e
topology: v5e:2x2
jax: 0.10.0
libtpu: 0.0.40
codegen_flags: <defaults>
</compile_context>

<pallas_src>
import functools

import jax
import jax.numpy as jnp
from jax import lax
from jax.experimental import pallas as pl
from jax.experimental.pallas import tpu as pltpu


def conv_block_kernel(x_ref, w_ref, b_ref, gmat_ref, g1_ref, g0_ref,
                      o_ref, acc_ref, *, gn_eps, bf16_tail):
    """One grid step = Bt batch elements (whole padded image each).

    x_ref:    (Bt, H+2, (W+2)*Cin) bf16  padded NHWC rows, (wi, ci) flattened on lanes
    w_ref:    (3, K, Cl)           bf16  banded weight per kernel row kh
    b_ref:    (1, Cl)              f32   conv bias per (wo, co) lane (0 on pad lanes)
    gmat_ref: (Cl, Cl)             f32   group-averaging matrix (entries 1/(H*W*cg))
    g1_ref:   (Bt, 1, Cl)          f32   gamma * (film_scale + 1), per lane
    g0_ref:   (Bt, 1, Cl)          f32   beta * (film_scale + 1) + film_shift
    o_ref:    (Bt, H, Cl)          bf16  lane-dense output (Cl = W*Cout padded to 128)
    acc_ref:  (Bt, H, Cl)          f32   VMEM accumulator scratch
    """
    Bt, _, K = x_ref.shape
    H, Cl = o_ref.shape[1], o_ref.shape[2]

    # --- 3x3 conv: three banded matmuls (one per kernel row), bf16 x bf16 -> f32 ---
    def tap(kh):
        return x_ref[:, kh:kh + H, :].reshape(Bt * H, K)

    acc = jnp.dot(tap(0), w_ref[0], preferred_element_type=jnp.float32)
    acc = acc + jnp.dot(tap(1), w_ref[1], preferred_element_type=jnp.float32)
    acc = acc + jnp.dot(tap(2), w_ref[2], preferred_element_type=jnp.float32)
    acc_ref[...] = acc.reshape(Bt, H, Cl)
    acc = acc_ref[...]

    # --- GroupNorm stats in f32; conv bias folded analytically into s1/s2 ---
    bias = b_ref[...]                                   # (1, Cl)
    s1 = jnp.sum(acc, axis=1)                           # (Bt, Cl) per-lane sum
    s2 = jnp.sum(acc * acc, axis=1)                     # (Bt, Cl) per-lane sum of squares
    hf = float(H)                                       # elements per lane
    s1b = s1 + hf * bias
    s2b = s2 + 2.0 * bias * s1 + hf * bias * bias
    s12 = jnp.concatenate([s1b, s2b], axis=0)           # (2*Bt, Cl), rows stacked
    gm = jnp.dot(s12, gmat_ref[...], preferred_element_type=jnp.float32)
    mean = gm[:Bt].reshape(Bt, 1, Cl)                   # group mean, per lane
    mean_sq = gm[Bt:].reshape(Bt, 1, Cl)                # group E[z^2], per lane
    var = jnp.maximum(mean_sq - mean * mean, 0.0)       # guard cancellation
    inv = lax.rsqrt(var + gn_eps)

    # --- fold GN affine + FiLM + conv bias into one per-lane scale & bias ---
    a = inv * g1_ref[...]                               # (Bt, 1, Cl)
    b2 = (bias - mean) * a + g0_ref[...]                # (Bt, 1, Cl)

    # --- tensor-wide tail: y = acc*a + b2, SiLU, dense bf16 store ---
    if bf16_tail:                                       # v6e / v7x: packed bf16 VPU/EUP
        y = (acc.astype(jnp.bfloat16) * a.astype(jnp.bfloat16)
             + b2.astype(jnp.bfloat16))
    else:                                               # v5e: keep tail in f32
        y = acc * a + b2
    y = y * jax.nn.sigmoid(y)
    o_ref[...] = y.astype(o_ref.dtype)


def _tpu_generation():
    kind = ""
    try:
        kind = jax.devices()[0].device_kind.lower()
    except Exception:
        pass
    is_v7 = "v7" in kind
    return dict(
        bf16_tail=("v6" in kind) or is_v7,     # bf16 tail only where VPU/EUP support it
        two_tc=is_v7,                          # keep grid >= 2 only on v7x (2 TCs)
        budget=(40 << 20) if is_v7 else (88 << 20),
        vmem_cap=(56 << 20) if is_v7 else (100 << 20),
    )


def _pick_block_batch(B, rows_per_img, per_batch_bytes, fixed_bytes, budget, two_tc):
    """Largest divisor of B fitting the VMEM budget; cap rows/step; keep grid>=2 on v7x."""
    fits = [d for d in range(1, B + 1)
            if B % d == 0 and fixed_bytes + d * per_batch_bytes <= budget]
    if not fits:
        fits = [1]
    capped = [d for d in fits if d * rows_per_img <= 2048] or [min(fits)]
    if two_tc and B >= 2:
        halves = [d for d in capped if B // d >= 2]
        if halves:
            return max(halves)
    return max(capped)


def _banded_weights(w_std, W, Cl):
    """(Cout,Cin,3,3) standardized weights -> (3, (W+2)*Cin, Cl) banded bf16 matrices."""
    Cout, Cin, KH, KW = w_std.shape
    wi = jnp.arange(W + 2)
    wo = jnp.arange(W)
    kw = wi[:, None] - wo[None, :]                                   # (W+2, W)
    valid = ((kw >= 0) & (kw <= KW - 1)).astype(w_std.dtype)
    kw_c = jnp.clip(kw, 0, KW - 1)
    mats = []
    for kh in range(KH):
        wsel = jnp.transpose(w_std[:, :, kh, :], (2, 1, 0))          # (KW, Cin, Cout)
        bk = wsel[kw_c] * valid[:, :, None, None]                    # (W+2, W, Cin, Cout)
        bk = jnp.transpose(bk, (0, 2, 1, 3)).reshape((W + 2) * Cin, W * Cout)
        mats.append(bk)
    wt = jnp.stack(mats, axis=0)                                     # (3, K, W*Cout)
    if Cl > W * Cout:
        wt = jnp.pad(wt, ((0, 0), (0, 0), (0, Cl - W * Cout)))
    return wt.astype(jnp.bfloat16)


def conv_block_forward(x_nchw, params, scale_shift=None, *, groups=8, gn_eps=1e-5):
    w, b, gamma, beta = params["w"], params["b"], params["gamma"], params["beta"]
    B, Cin, H, W = x_nchw.shape
    Cout = w.shape[0]
    assert Cout % groups == 0
    cg = Cout // groups

    Cl_real = W * Cout
    Cl = ((Cl_real + 127) // 128) * 128        # pad output lanes to a multiple of 128
    K = (W + 2) * Cin
    Hp = H + 2
    # TODO(synk): for large W / Cout, tile W with a halo (banded-weight FLOP inflation
    # grows as (W+2)/3) and factor the (Cl,Cl) group matrix into (Cl,G)x(G,Cl).

    gen = _tpu_generation()

    # Weight standardization in f32 (eps below bf16 resolution), then banded bf16.
    ws_eps = 1e-5
    w_mean = jnp.mean(w, axis=(1, 2, 3), keepdims=True)
    w_var = jnp.var(w, axis=(1, 2, 3), keepdims=True)
    w_std = (w - w_mean) * lax.rsqrt(w_var + ws_eps)
    w_taps = _banded_weights(w_std.astype(jnp.float32), W, Cl)       # (3, K, Cl) bf16

    # Input: cast to bf16 FIRST (halves transpose/pad traffic), NHWC, pad, flatten.
    xh = jnp.transpose(x_nchw.astype(jnp.bfloat16), (0, 2, 3, 1))    # (B, H, W, Cin)
    xp = jnp.pad(xh, ((0, 0), (1, 1), (1, 1), (0, 0)))
    xflat = xp.reshape(B, Hp, K)

    # Per-lane (wo, co) parameters; pad lanes get zeros.
    pad = Cl - Cl_real
    bias_l = jnp.pad(jnp.tile(b.astype(jnp.float32), W), (0, pad)).reshape(1, Cl)
    gamma_l = jnp.pad(jnp.tile(gamma.astype(jnp.float32), W), (0, pad))
    beta_l = jnp.pad(jnp.tile(beta.astype(jnp.float32), W), (0, pad))

    if scale_shift is None:
        scale = jnp.zeros((B, Cout), jnp.float32)
        shift = jnp.zeros((B, Cout), jnp.float32)
    else:
        scale, shift = scale_shift
        scale = scale.reshape(B, Cout).astype(jnp.float32)
        shift = shift.reshape(B, Cout).astype(jnp.float32)
    scale_l = jnp.pad(jnp.tile(scale, (1, W)), ((0, 0), (0, pad)))
    shift_l = jnp.pad(jnp.tile(shift, (1, W)), ((0, 0), (0, pad)))
    g1 = (gamma_l[None, :] * (scale_l + 1.0)).reshape(B, 1, Cl)
    g0 = (beta_l[None, :] * (scale_l + 1.0) + shift_l).reshape(B, 1, Cl)

    # Group-averaging matrix: lane -> group mean per lane; zero rows for pad lanes.
    lane = jnp.arange(Cl)
    gid = (lane % Cout) // cg
    real = (lane < Cl_real).astype(jnp.float32)
    gmat = ((gid[:, None] == gid[None, :]).astype(jnp.float32)
            * real[:, None]) / float(H * W * cg)

    # Generation-aware block-batch & VMEM budget (double-buffering counted once).
    per_batch = (2 * Hp * K * 2          # input block, bf16, double buffered
                 + 2 * H * Cl * 2        # output block, bf16, double buffered
                 + H * Cl * 4            # f32 accumulator scratch
                 + 2 * 2 * Cl * 4)       # g1/g0 blocks, double buffered
    fixed = 2 * (w_taps.size * 2 + gmat.size * 4 + Cl * 4)
    Bt = _pick_block_batch(B, H, per_batch, fixed, gen["budget"], gen["two_tc"])
    grid = (B // Bt,)
    vmem_limit = int(min(max(fixed + Bt * per_batch + (8 << 20), 16 << 20),
                         gen["vmem_cap"]))

    kernel = functools.partial(conv_block_kernel, gn_eps=gn_eps,
                               bf16_tail=gen["bf16_tail"])

    cost = pl.CostEstimate(
        flops=int(2 * 3 * B * H * K * Cl + 2 * 2 * B * Cl * Cl + 6 * B * H * Cl),
        transcendentals=int(B * H * Cl),
        bytes_accessed=int(xflat.size * 2 + w_taps.size * 2 + gmat.size * 4
                           + (1 + 2 * B) * Cl * 4 + B * H * Cl * 2),
    )

    out_lanes = pl.pallas_call(
        kernel,
        out_shape=jax.ShapeDtypeStruct((B, H, Cl), jnp.bfloat16),
        grid_spec=pltpu.PrefetchScalarGridSpec(
            num_scalar_prefetch=0,
            grid=grid,
            in_specs=[
                pl.BlockSpec((Bt, Hp, K), lambda bb: (bb, 0, 0)),
                pl.BlockSpec((3, K, Cl), lambda bb: (0, 0, 0)),
                pl.BlockSpec((1, Cl), lambda bb: (0, 0)),
                pl.BlockSpec((Cl, Cl), lambda bb: (0, 0)),
                pl.BlockSpec((Bt, 1, Cl), lambda bb: (bb, 0, 0)),
                pl.BlockSpec((Bt, 1, Cl), lambda bb: (bb, 0, 0)),
            ],
            out_specs=pl.BlockSpec((Bt, H, Cl), lambda bb: (bb, 0, 0)),
            scratch_shapes=[pltpu.VMEM((Bt, H, Cl), jnp.float32)],
        ),
        compiler_params=pltpu.CompilerParams(
            dimension_semantics=("parallel",),
            vmem_limit_bytes=vmem_limit,
        ),
        cost_estimate=cost,
    )(xflat, w_taps, bias_l, gmat, g1, g0)

    # (B, H, W*Cout [+pad]) bf16 -> (B, Cout, H, W) in the input dtype.
    out = out_lanes[:, :, :Cl_real].reshape(B, H, W, Cout)
    return jnp.transpose(out, (0, 3, 1, 2)).astype(x_nchw.dtype)


def conv_block_reference(x, params, scale_shift=None, *, groups=8, gn_eps=1e-5):
    """Pure-JAX reference mirroring the PyTorch module (NCHW, f32 HIGHEST)."""
    w, b, gamma, beta = params["w"], params["b"], params["gamma"], params["beta"]
    ws_eps = 1e-5
    w_mean = jnp.mean(w, axis=(1, 2, 3), keepdims=True)
    w_var = jnp.var(w, axis=(1, 2, 3), keepdims=True)
    wn = (w - w_mean) / jnp.sqrt(w_var + ws_eps)
    y = lax.conv_general_dilated(
        x, wn, window_strides=(1, 1), padding=((1, 1), (1, 1)),
        dimension_numbers=("NCHW", "OIHW", "NCHW"),
        precision=lax.Precision.HIGHEST)
    y = y + b.reshape(1, -1, 1, 1)
    B, C, H, W = y.shape
    yg = y.reshape(B, groups, C // groups, H, W)
    m = jnp.mean(yg, axis=(2, 3, 4), keepdims=True)
    v = jnp.var(yg, axis=(2, 3, 4), keepdims=True)
    yn = ((yg - m) / jnp.sqrt(v + gn_eps)).reshape(B, C, H, W)
    yn = yn * gamma.reshape(1, -1, 1, 1) + beta.reshape(1, -1, 1, 1)
    if scale_shift is not None:
        scale, shift = scale_shift
        yn = yn * (scale + 1.0) + shift
    return yn * jax.nn.sigmoid(yn)


if __name__ == "__main__":
    B, dim, dim_out, H, W, groups = 2, 4, 16, 16, 16, 8

    key = jax.random.PRNGKey(0)
    k_x, k_w, k_b, k_s, k_t = jax.random.split(key, 5)

    x = jax.random.normal(k_x, (B, dim, H, W), jnp.float32)

    params = {
        "w": 0.2 * jax.random.normal(k_w, (dim_out, dim, 3, 3), jnp.float32),
        "b": 0.1 * jax.random.normal(k_b, (dim_out,), jnp.float32),
        "gamma": jnp.ones((dim_out,), jnp.float32),    # nn.GroupNorm default init
        "beta": jnp.zeros((dim_out,), jnp.float32),
    }

    # FiLM-style conditioning, same shape PyTorch would broadcast: (B, dim_out, 1, 1)
    scale = 0.3 * jax.random.normal(k_s, (B, dim_out, 1, 1), jnp.float32)
    shift = 0.3 * jax.random.normal(k_t, (B, dim_out, 1, 1), jnp.float32)
    scale_shift = (scale, shift)

    # With scale/shift conditioning.
    out = conv_block_forward(x, params, scale_shift, groups=groups)
    out = jax.block_until_ready(out)
    ref = conv_block_reference(x, params, scale_shift, groups=groups)
    assert out.shape == (B, dim_out, H, W)
    assert bool(jnp.allclose(out, ref, atol=3e-2, rtol=3e-2)), "mismatch vs reference"

    # Without scale/shift (identity FiLM path).
    out2 = conv_block_forward(x, params, None, groups=groups)
    out2 = jax.block_until_ready(out2)
    ref2 = conv_block_reference(x, params, None, groups=groups)
    assert bool(jnp.allclose(out2, ref2, atol=3e-2, rtol=3e-2)), "mismatch (no FiLM)"

    print("KERNEL_OK")
</pallas_src>

<mosaic_0001>
module attributes {stable_mosaic.version = 11 : i64} {
  func.func @conv_block_kernel(%arg0: i32, %arg1: memref<2x18x72xbf16, #tpu.memory_space<vmem>>, %arg2: memref<3x72x256xbf16, #tpu.memory_space<vmem>>, %arg3: memref<1x256xf32, #tpu.memory_space<vmem>>, %arg4: memref<256x256xf32, #tpu.memory_space<vmem>>, %arg5: memref<2x1x256xf32, #tpu.memory_space<vmem>>, %arg6: memref<2x1x256xf32, #tpu.memory_space<vmem>>, %arg7: memref<2x16x256xbf16, #tpu.memory_space<vmem>>, %arg8: memref<2x16x256xf32, #tpu.memory_space<vmem>>) attributes {dimension_semantics = [#tpu.dimension_semantics<parallel>], iteration_bounds = array<i64: 1>, scalar_prefetch = 0 : i64, scratch_operands = 1 : i64, tpu.core_type = #tpu.core_type<tc>, window_params = [{transform_indices = @transform_0, window_bounds = array<i64: 2, 18, 72>}, {pipeline_mode = #tpu.pipeline_mode<synchronous>, transform_indices = @transform_1, window_bounds = array<i64: 3, 72, 256>}, {pipeline_mode = #tpu.pipeline_mode<synchronous>, transform_indices = @transform_2, window_bounds = array<i64: 1, 256>}, {pipeline_mode = #tpu.pipeline_mode<synchronous>, transform_indices = @transform_3, window_bounds = array<i64: 256, 256>}, {transform_indices = @transform_4, window_bounds = array<i64: 2, 1, 256>}, {transform_indices = @transform_5, window_bounds = array<i64: 2, 1, 256>}, {transform_indices = @transform_6, window_bounds = array<i64: 2, 16, 256>}]} {
    %c0 = arith.constant 0 : index
    %c0_0 = arith.constant 0 : index
    %c0_1 = arith.constant 0 : index
    %0 = vector.load %arg1[%c0, %c0_0, %c0_1] : memref<2x18x72xbf16, #tpu.memory_space<vmem>>, vector<2x16x72xbf16>
    %1 = vector.shape_cast %0 : vector<2x16x72xbf16> to vector<32x72xbf16>
    %c0_2 = arith.constant 0 : index
    %c0_3 = arith.constant 0 : index
    %c0_4 = arith.constant 0 : index
    %2 = vector.load %arg2[%c0_2, %c0_3, %c0_4] : memref<3x72x256xbf16, #tpu.memory_space<vmem>>, vector<1x72x256xbf16>
    %3 = vector.shape_cast %2 : vector<1x72x256xbf16> to vector<72x256xbf16>
    %cst = arith.constant dense<0.000000e+00> : vector<32x256xf32>
    %4 = tpu.matmul %1, %3, %cst {dimension_numbers = #tpu.dot_dimension_numbers<[1], [0], [0], [1], [0, 0, 1, 1], [], []>} : vector<32x72xbf16>, vector<72x256xbf16>, vector<32x256xf32> -> vector<32x256xf32>
    %c0_5 = arith.constant 0 : index
    %c1 = arith.constant 1 : index
    %c0_6 = arith.constant 0 : index
    %5 = vector.load %arg1[%c0_5, %c1, %c0_6] : memref<2x18x72xbf16, #tpu.memory_space<vmem>>, vector<2x16x72xbf16>
    %6 = vector.shape_cast %5 : vector<2x16x72xbf16> to vector<32x72xbf16>
    %c1_7 = arith.constant 1 : index
    %c0_8 = arith.constant 0 : index
    %c0_9 = arith.constant 0 : index
    %7 = vector.load %arg2[%c1_7, %c0_8, %c0_9] : memref<3x72x256xbf16, #tpu.memory_space<vmem>>, vector<1x72x256xbf16>
    %8 = vector.shape_cast %7 : vector<1x72x256xbf16> to vector<72x256xbf16>
    %cst_10 = arith.constant dense<0.000000e+00> : vector<32x256xf32>
    %9 = tpu.matmul %6, %8, %cst_10 {dimension_numbers = #tpu.dot_dimension_numbers<[1], [0], [0], [1], [0, 0, 1, 1], [], []>} : vector<32x72xbf16>, vector<72x256xbf16>, vector<32x256xf32> -> vector<32x256xf32>
    %10 = arith.addf %4, %9 : vector<32x256xf32>
    %c0_11 = arith.constant 0 : index
    %c2 = arith.constant 2 : index
    %c0_12 = arith.constant 0 : index
    %11 = vector.load %arg1[%c0_11, %c2, %c0_12] : memref<2x18x72xbf16, #tpu.memory_space<vmem>>, vector<2x16x72xbf16>
    %12 = vector.shape_cast %11 : vector<2x16x72xbf16> to vector<32x72xbf16>
    %c2_13 = arith.constant 2 : index
    %c0_14 = arith.constant 0 : index
    %c0_15 = arith.constant 0 : index
    %13 = vector.load %arg2[%c2_13, %c0_14, %c0_15] : memref<3x72x256xbf16, #tpu.memory_space<vmem>>, vector<1x72x256xbf16>
    %14 = vector.shape_cast %13 : vector<1x72x256xbf16> to vector<72x256xbf16>
    %cst_16 = arith.constant dense<0.000000e+00> : vector<32x256xf32>
    %15 = tpu.matmul %12, %14, %cst_16 {dimension_numbers = #tpu.dot_dimension_numbers<[1], [0], [0], [1], [0, 0, 1, 1], [], []>} : vector<32x72xbf16>, vector<72x256xbf16>, vector<32x256xf32> -> vector<32x256xf32>
    %16 = arith.addf %10, %15 : vector<32x256xf32>
    %17 = vector.shape_cast %16 : vector<32x256xf32> to vector<2x16x256xf32>
    %c0_17 = arith.constant 0 : index
    %c0_18 = arith.constant 0 : index
    %c0_19 = arith.constant 0 : index
    %18 = vector.load %arg8[%c0_17, %c0_18, %c0_19] : memref<2x16x256xf32, #tpu.memory_space<vmem>>, vector<2x16x256xf32>
    tpu.vector_store %arg8[%c0_17, %c0_18, %c0_19], %17 {strides = array<i32>} : memref<2x16x256xf32, #tpu.memory_space<vmem>>, vector<2x16x256xf32>,
    %c0_20 = arith.constant 0 : index
    %c0_21 = arith.constant 0 : index
    %c0_22 = arith.constant 0 : index
    %19 = vector.load %arg8[%c0_20, %c0_21, %c0_22] : memref<2x16x256xf32, #tpu.memory_space<vmem>>, vector<2x16x256xf32>
    %c0_23 = arith.constant 0 : index
    %c0_24 = arith.constant 0 : index
    %20 = vector.load %arg3[%c0_23, %c0_24] : memref<1x256xf32, #tpu.memory_space<vmem>>, vector<1x256xf32>
    %cst_25 = arith.constant dense<0.000000e+00> : vector<2x256xf32>
    %21 = vector.multi_reduction <add>, %19, %cst_25 [1] : vector<2x16x256xf32> to vector<2x256xf32>
    %22 = arith.mulf %19, %19 : vector<2x16x256xf32>
    %cst_26 = arith.constant dense<0.000000e+00> : vector<2x256xf32>
    %23 = vector.multi_reduction <add>, %22, %cst_26 [1] : vector<2x16x256xf32> to vector<2x256xf32>
    %cst_27 = arith.constant 1.600000e+01 : f32
    %24 = vector.broadcast %cst_27 : f32 to vector<1x256xf32>
    %25 = arith.mulf %24, %20 : vector<1x256xf32>
    %26 = vector.broadcast %25 : vector<1x256xf32> to vector<2x256xf32>
    %27 = arith.addf %21, %26 : vector<2x256xf32>
    %cst_28 = arith.constant 2.000000e+00 : f32
    %28 = vector.broadcast %cst_28 : f32 to vector<1x256xf32>
    %29 = arith.mulf %28, %20 : vector<1x256xf32>
    %30 = vector.broadcast %29 : vector<1x256xf32> to vector<2x256xf32>
    %31 = arith.mulf %30, %21 : vector<2x256xf32>
    %32 = arith.addf %23, %31 : vector<2x256xf32>
    %cst_29 = arith.constant 1.600000e+01 : f32
    %33 = vector.broadcast %cst_29 : f32 to vector<1x256xf32>
    %34 = arith.mulf %33, %20 : vector<1x256xf32>
    %35 = arith.mulf %34, %20 : vector<1x256xf32>
    %36 = vector.broadcast %35 : vector<1x256xf32> to vector<2x256xf32>
    %37 = arith.addf %32, %36 : vector<2x256xf32>
    %38 = tpu.concatenate %27, %37 in 0 : vector<2x256xf32>, vector<2x256xf32> -> vector<4x256xf32>
    %c0_30 = arith.constant 0 : index
    %c0_31 = arith.constant 0 : index
    %39 = vector.load %arg4[%c0_30, %c0_31] : memref<256x256xf32, #tpu.memory_space<vmem>>, vector<256x256xf32>
    %cst_32 = arith.constant dense<0.000000e+00> : vector<4x256xf32>
    %40 = tpu.matmul %38, %39, %cst_32 {dimension_numbers = #tpu.dot_dimension_numbers<[1], [0], [0], [1], [0, 0, 1, 1], [], []>} : vector<4x256xf32>, vector<256x256xf32>, vector<4x256xf32> -> vector<4x256xf32>
    %41 = vector.extract_strided_slice %40 {offsets = [0, 0], sizes = [2, 256], strides = [1, 1]} : vector<4x256xf32> to vector<2x256xf32>
    %42 = vector.shape_cast %41 : vector<2x256xf32> to vector<2x1x256xf32>
    %43 = vector.extract_strided_slice %40 {offsets = [2, 0], sizes = [2, 256], strides = [1, 1]} : vector<4x256xf32> to vector<2x256xf32>
    %44 = vector.shape_cast %43 : vector<2x256xf32> to vector<2x1x256xf32>
    %45 = arith.mulf %42, %42 : vector<2x1x256xf32>
    %46 = arith.subf %44, %45 : vector<2x1x256xf32>
    %cst_33 = arith.constant 0.000000e+00 : f32
    %47 = vector.broadcast %cst_33 : f32 to vector<2x1x256xf32>
    %48 = arith.maximumf %46, %47 : vector<2x1x256xf32>
    %cst_34 = arith.constant 9.99999974E-6 : f32
    %49 = vector.broadcast %cst_34 : f32 to vector<2x1x256xf32>
    %50 = arith.addf %48, %49 : vector<2x1x256xf32>
    %51 = math.rsqrt %50 : vector<2x1x256xf32>
    %c0_35 = arith.constant 0 : index
    %c0_36 = arith.constant 0 : index
    %c0_37 = arith.constant 0 : index
    %52 = vector.load %arg5[%c0_35, %c0_36, %c0_37] : memref<2x1x256xf32, #tpu.memory_space<vmem>>, vector<2x1x256xf32>
    %53 = arith.mulf %51, %52 : vector<2x1x256xf32>
    %54 = vector.shape_cast %20 : vector<1x256xf32> to vector<1x1x256xf32>
    %55 = vector.broadcast %54 : vector<1x1x256xf32> to vector<2x1x256xf32>
    %56 = arith.subf %55, %42 : vector<2x1x256xf32>
    %57 = arith.mulf %56, %53 : vector<2x1x256xf32>
    %c0_38 = arith.constant 0 : index
    %c0_39 = arith.constant 0 : index
    %c0_40 = arith.constant 0 : index
    %58 = vector.load %arg6[%c0_38, %c0_39, %c0_40] : memref<2x1x256xf32, #tpu.memory_space<vmem>>, vector<2x1x256xf32>
    %59 = arith.addf %57, %58 : vector<2x1x256xf32>
    %60 = vector.broadcast %53 : vector<2x1x256xf32> to vector<2x16x256xf32>
    %61 = arith.mulf %19, %60 : vector<2x16x256xf32>
    %62 = vector.broadcast %59 : vector<2x1x256xf32> to vector<2x16x256xf32>
    %63 = arith.addf %61, %62 : vector<2x16x256xf32>
    %64 = arith.negf %63 : vector<2x16x256xf32>
    %65 = math.exp %64 : vector<2x16x256xf32>
    %cst_41 = arith.constant 1.000000e+00 : f32
    %66 = vector.broadcast %cst_41 : f32 to vector<2x16x256xf32>
    %67 = arith.addf %66, %65 : vector<2x16x256xf32>
    %68 = arith.divf %66, %67 : vector<2x16x256xf32>
    %69 = arith.mulf %63, %68 : vector<2x16x256xf32>
    %70 = arith.truncf %69 : vector<2x16x256xf32> to vector<2x16x256xbf16>
    %c0_42 = arith.constant 0 : index
    %c0_43 = arith.constant 0 : index
    %c0_44 = arith.constant 0 : index
    %71 = vector.load %arg7[%c0_42, %c0_43, %c0_44] : memref<2x16x256xbf16, #tpu.memory_space<vmem>>, vector<2x16x256xbf16>
    tpu.vector_store %arg7[%c0_42, %c0_43, %c0_44], %70 {strides = array<i32>} : memref<2x16x256xbf16, #tpu.memory_space<vmem>>, vector<2x16x256xbf16>,
    return
  }
  func.func @transform_0(%arg0: i32) -> (i32, i32, i32) {
    %c0_i32 = arith.constant 0 : i32
    %c0_i32_0 = arith.constant 0 : i32
    %c0_i32_1 = arith.constant 0 : i32
    return %arg0, %c0_i32, %c0_i32_0 : i32, i32, i32
  }
  func.func @transform_1(%arg0: i32) -> (i32, i32, i32) {
    %c0_i32 = arith.constant 0 : i32
    %c0_i32_0 = arith.constant 0 : i32
    %c0_i32_1 = arith.constant 0 : i32
    %c0_i32_2 = arith.constant 0 : i32
    return %c0_i32, %c0_i32_0, %c0_i32_1 : i32, i32, i32
  }
  func.func @transform_2(%arg0: i32) -> (i32, i32) {
    %c0_i32 = arith.constant 0 : i32
    %c0_i32_0 = arith.constant 0 : i32
    %c0_i32_1 = arith.constant 0 : i32
    return %c0_i32, %c0_i32_0 : i32, i32
  }
  func.func @transform_3(%arg0: i32) -> (i32, i32) {
    %c0_i32 = arith.constant 0 : i32
    %c0_i32_0 = arith.constant 0 : i32
    %c0_i32_1 = arith.constant 0 : i32
    return %c0_i32, %c0_i32_0 : i32, i32
  }
  func.func @transform_4(%arg0: i32) -> (i32, i32, i32) {
    %c0_i32 = arith.constant 0 : i32
    %c0_i32_0 = arith.constant 0 : i32
    %c0_i32_1 = arith.constant 0 : i32
    return %arg0, %c0_i32, %c0_i32_0 : i32, i32, i32
  }
  func.func @transform_5(%arg0: i32) -> (i32, i32, i32) {
    %c0_i32 = arith.constant 0 : i32
    %c0_i32_0 = arith.constant 0 : i32
    %c0_i32_1 = arith.constant 0 : i32
    return %arg0, %c0_i32, %c0_i32_0 : i32, i32, i32
  }
  func.func @transform_6(%arg0: i32) -> (i32, i32, i32) {
    %c0_i32 = arith.constant 0 : i32
    %c0_i32_0 = arith.constant 0 : i32
    %c0_i32_1 = arith.constant 0 : i32
    return %arg0, %c0_i32, %c0_i32_0 : i32, i32, i32
  }
}

</mosaic_0001>

<llo_original>
// kernel: tpu_custom_call.1
$region0: #{tpu_custom_call.1}
  #allocation0 [shape = 'u32[]', space=smem, size = 0x4, offset = 0x4, fixed_abs, tag = 'smem constant byte address 0x4 - core index']
  #allocation1 [shape = 'u32[72,128]{1,0:T(1,128)}', space=vmem, size = 0x9000, scoped, tag = 'internal scratch']
  #allocation2 [shape = 'f32[2,16,256]{2,1,0:T(8,128)}', space=vmem, size = 0x8000, scoped, tag = 'scratch operand']
  %s0 = inlined_call_operand.vmem [shape: bf16[2,18,72], index: 0, kind: input, shape index: {}]
  %s1 = inlined_call_operand.hbm [shape: bf16[3,72,256], index: 1, kind: input, shape index: {}]
  %s2 = inlined_call_operand.vmem [shape: f32[1,256], index: 2, kind: input, shape index: {}]
  %s3 = inlined_call_operand.hbm [shape: f32[256,256], index: 3, kind: input, shape index: {}]
  %s4 = inlined_call_operand.vmem [shape: f32[2,1,256], index: 4, kind: input, shape index: {}]
  %s5 = inlined_call_operand.vmem [shape: f32[2,1,256], index: 5, kind: input, shape index: {}]
  %s6 = inlined_call_operand.hbm [shape: bf16[2,16,256], index: 6, kind: output, shape index: {}]
  %s7 = sld [smem:[#allocation0]]
  $region42: #{tpu_custom_call.1} parent=0
    _
  %s9 = ssub.s32 1, %s7
  %s10 = scalar_select 0, %s9, %s7
  $region1: #{tpu_custom_call.1} parent=0
    #allocation3 [shape = 'u8[110592]{0}', space=vmem, size = 0x1b000, scoped, tag = 'input window, operand 1, single buffered']
    #allocation4 [shape = 's32[1]{0}', space=sflag, size = 0x4, scoped, tag = 'scoped memory for tpu_custom_call.1']
    #allocation5 [shape = 's32[1]{0}', space=sflag, size = 0x4, scoped, tag = 'scoped memory for tpu_custom_call.1']
    #allocation6 [shape = 'u8[262144]{0}', space=vmem, size = 0x40000, scoped, tag = 'input window, operand 3, single buffered']
    #allocation7 [shape = 's32[1]{0}', space=sflag, size = 0x4, scoped, tag = 'scoped memory for tpu_custom_call.1']
    #allocation8 [shape = 'u8[16384]{0}', space=vmem, size = 0x4000, scoped, tag = 'output window, operand 0, single buffered']
    %11 = vsyncpa [#allocation4], 0
    %12 = vsyncpa [#allocation7], 0
    %13 = vsyncpa [#allocation5], 0
    // Predicated region
    $region2: #{tpu_custom_call.1} parent=1 // pred_check
      _
    $region3: #{tpu_custom_call.1} parent=1 // pred_check_branch
      %15 = sbr.rel (0) target = $region5
    $region4: #{tpu_custom_call.1} parent=1 // pred_region
      _
    $region5: #{tpu_custom_call.1} parent=1 // pred_fallthru
      _
    // Predicated region
    $region6: #{tpu_custom_call.1} parent=1 // pred_check
      _
    $region7: #{tpu_custom_call.1} parent=1 // pred_check_branch
      %17 = sbr.rel (0) target = $region9
    $region8: #{tpu_custom_call.1} parent=1 // pred_region
      %19 = vsyncadd [#allocation4], 0
      %s20 = sshll.u32 %s1, 4
      %s21 = int_to_ptr.hbm [resolvable:$true] %s20
      %s22 = sshll.u32 [#allocation3], 4
      %s23 = int_to_ptr.vmem [resolvable:$true] %s22
      %28 = dma.hbm_to_vmem [thread:$0]  %s21, 3456, %s23, [#allocation4], 128, 128, 8
    $region9: #{tpu_custom_call.1} parent=1 // pred_fallthru
      _
    // Predicated region
    $region10: #{tpu_custom_call.1} parent=1 // pred_check
      _
    $region11: #{tpu_custom_call.1} parent=1 // pred_check_branch
      %30 = sbr.rel (0) target = $region13
    $region12: #{tpu_custom_call.1} parent=1 // pred_region
      _
    $region13: #{tpu_custom_call.1} parent=1 // pred_fallthru
      _
    // Predicated region
    $region14: #{tpu_custom_call.1} parent=1 // pred_check
      _
    $region15: #{tpu_custom_call.1} parent=1 // pred_check_branch
      %32 = sbr.rel (0) target = $region17
    $region16: #{tpu_custom_call.1} parent=1 // pred_region
      %34 = vsyncadd [#allocation7], 0
      %s35 = sshll.u32 %s3, 4
      %s36 = int_to_ptr.hbm [resolvable:$true] %s35
      %s37 = sshll.u32 [#allocation6], 4
      %s38 = int_to_ptr.vmem [resolvable:$true] %s37
      %43 = dma.hbm_to_vmem [thread:$0]  %s36, 8192, %s38, [#allocation7], 256, 256, 16
    $region17: #{tpu_custom_call.1} parent=1 // pred_fallthru
      _
    // Predicated region
    $region18: #{tpu_custom_call.1} parent=1 // pred_check
      _
    $region19: #{tpu_custom_call.1} parent=1 // pred_check_branch
      %45 = sbr.rel (0) target = $region21
    $region20: #{tpu_custom_call.1} parent=1 // pred_region
      _
    $region21: #{tpu_custom_call.1} parent=1 // pred_fallthru
      _
    // Predicated region
    $region22: #{tpu_custom_call.1} parent=1 // pred_check
      _
    $region23: #{tpu_custom_call.1} parent=1 // pred_check_branch
      %47 = sbr.rel (0) target = $region25
    $region24: #{tpu_custom_call.1} parent=1 // pred_region
      _
    $region25: #{tpu_custom_call.1} parent=1 // pred_fallthru
      _
    // Predicated region
    $region26: #{tpu_custom_call.1} parent=1 // pred_check
      _
    $region27: #{tpu_custom_call.1} parent=1 // pred_check_branch
      %49 = sbr.rel (0) target = $region29
    $region28: #{tpu_custom_call.1} parent=1 // pred_region
      %51 = dma.done [#allocation4], 3456
    $region29: #{tpu_custom_call.1} parent=1 // pred_fallthru
      _
    // Predicated region
    $region30: #{tpu_custom_call.1} parent=1 // pred_check
      _
    $region31: #{tpu_custom_call.1} parent=1 // pred_check_branch
      %53 = sbr.rel (0) target = $region33
    $region32: #{tpu_custom_call.1} parent=1 // pred_region
      %55 = dma.done [#allocation7], 8192
    $region33: #{tpu_custom_call.1} parent=1 // pred_fallthru
      _
    %v57 = vld [vmem:[%s0] sm:$0xf]
    %v58 = vld [vmem:[%s0 + $0x4] sm:$0xf]
    %v59 = vld [vmem:[%s0 + $0xc] sm:$0xf]
    %v60 = vld [vmem:[%s0 + $0x10] sm:$0xf]
    %v61 = vld [vmem:[#allocation3] sm:$0xff]
    %v62 = vld [vmem:[#allocation3 + $0x8] sm:$0xff]
    %v63 = vld [vmem:[#allocation3 + $0x10] sm:$0xff]
    %v64 = vld [vmem:[#allocation3 + $0x18] sm:$0xff]
    %v65 = vld [vmem:[#allocation3 + $0x20] sm:$0xff]
    %v66 = vld [vmem:[#allocation3 + $0x28] sm:$0xff]
    %v67 = vld [vmem:[#allocation3 + $0x30] sm:$0xff]
    %v68 = vld [vmem:[#allocation3 + $0x38] sm:$0xff]
    %v69 = vld [vmem:[#allocation3 + $0x40] sm:$0xff]
    %v70 = vld [vmem:[%s0 + $0x8] sm:$0x1]
    %v71 = vld [vmem:[%s0 + $0x14] sm:$0x1]
    %vm72 = vsmask.f32 3328
    %vm73 = vsmask.f32 7440
    %vm74 = vmor %vm72, %vm73
    %v76 = vshrl.u32 %v57, 16
    %v78 = vrot.slane %v76, 4
    %v79 = vshll.u32 %v57, 16
    %v81 = vrot.slane %v79, 5
    %v82 = vor.u32 %v78, %v81
    %v83 = vrot.slane %v82, 4
    %v85 = vshll.u32 %v58, 16
    %v87 = vrot.slane %v85, 5
    %v88 = vsel %vm74, %v83, %v87
    %v89 = vshrl.u32 %v58, 16
    %v91 = vrot.slane %v89, 4
    %v92 = vor.u32 %v91, %v87
    %v93 = vrot.slane %v92, 4
    %v95 = vshll.u32 %v70, 16
    %v97 = vrot.slane %v95, 5
    %v98 = vsel %vm74, %v93, %v97
    %v100 = vshrl.u32 %v59, 16
    %v102 = vrot.slane %v100, 4
    %v103 = vshll.u32 %v59, 16
    %v105 = vrot.slane %v103, 5
    %v106 = vor.u32 %v102, %v105
    %v107 = vrot.slane %v106, 4
    %v109 = vshll.u32 %v60, 16
    %v111 = vrot.slane %v109, 5
    %v112 = vsel %vm74, %v107, %v111
    %v113 = vshrl.u32 %v60, 16
    %v115 = vrot.slane %v113, 4
    %v116 = vor.u32 %v115, %v111
    %v117 = vrot.slane %v116, 4
    %v119 = vshll.u32 %v71, 16
    %v121 = vrot.slane %v119, 5
    %v122 = vsel %vm74, %v117, %v121
    %s123 = scalar_lea.vmem [#allocation3], 72
    %v124 = vld [vmem:[%s123] sm:$0xff]
    %v125 = vld [vmem:[%s123 + $0x8] sm:$0xff]
    %v126 = vld [vmem:[%s123 + $0x10] sm:$0xff]
    %v127 = vld [vmem:[%s123 + $0x18] sm:$0xff]
    %v128 = vld [vmem:[%s123 + $0x20] sm:$0xff]
    %v129 = vld [vmem:[%s123 + $0x28] sm:$0xff]
    %v130 = vld [vmem:[%s123 + $0x30] sm:$0xff]
    %v131 = vld [vmem:[%s123 + $0x38] sm:$0xff]
    %v132 = vld [vmem:[%s123 + $0x40] sm:$0xff]
    %v133 = vunpack.c.l.b16 %v88
    %v134 = vunpack.c.l.b16 %v98
    %v135 = vunpack.c.l.b16 %v112
    %v136 = vunpack.c.l.b16 %v122
    %v137 = vpack.c.b16 %v134, %v133
    %v138 = vpack.c.b16 %v136, %v135
    %v148 = vunpack.c.l.b16 %v124
    %v149 = vunpack.c.h.b16 %v124
    %v150 = vunpack.c.l.b16 %v125
    %v151 = vunpack.c.h.b16 %v125
    %v152 = vunpack.c.l.b16 %v126
    %v153 = vunpack.c.h.b16 %v126
    %v154 = vunpack.c.l.b16 %v127
    %v155 = vunpack.c.h.b16 %v127
    %v156 = vunpack.c.l.b16 %v128
    %v157 = vunpack.c.h.b16 %v128
    %v158 = vunpack.c.l.b16 %v129
    %v159 = vunpack.c.h.b16 %v129
    %v160 = vunpack.c.l.b16 %v130
    %v161 = vunpack.c.h.b16 %v130
    %v162 = vunpack.c.l.b16 %v131
    %v163 = vunpack.c.h.b16 %v131
    %v164 = vunpack.c.l.b16 %v132
    %v165 = vunpack.c.h.b16 %v132
    %v166 = vpack.c.b16 %v150, %v148
    %v167 = vpack.c.b16 %v151, %v149
    %v168 = vpack.c.b16 %v154, %v152
    %v169 = vpack.c.b16 %v155, %v153
    %v170 = vpack.c.b16 %v158, %v156
    %v171 = vpack.c.b16 %v159, %v157
    %v172 = vpack.c.b16 %v162, %v160
    %v173 = vpack.c.b16 %v163, %v161
    %v174 = vpack.c.b16 %v164, %v164
    %v175 = vpack.c.b16 %v165, %v165
    %vm184 = vcmask 588800
    %v186 = vsel %vm184, %v137, 0
    %v189 = vsel %vm184, %v138, 0
    %vm191 = vcmask 1043456
    %v193 = vsel %vm191, %v174, 0
    %v196 = vsel %vm191, %v175, 0
    %198 = vmatpush.bf16.msra.mxu0 0
    %199 = vmatpush.bf16.msra.mxu0 0
    %200 = vmatpush.bf16.msra.mxu0 0
    %201 = vmatpush.bf16.msra.mxu0 %v193
    %202 = vmatpush.bf16.msra.mxu0 %v172
    %203 = vmatpush.bf16.msra.mxu0 %v170
    %204 = vmatpush.bf16.msra.mxu0 %v168
    %205 = vmatpush.bf16.msra.mxu0 %v166
    %206 = vmatmul.bf16.gmra.mxu0 %v186
    %v207 = vpop.f32.mrf.mxu0
    %v208 = vadd.f32 0.0, %v207
    %v209 = vpop.f32.mrf.mxu0
    %v210 = vadd.f32 0.0, %v209
    %211 = vmatmul.bf16.gmra.mxu0 %v189
    %v212 = vpop.f32.mrf.mxu0
    %v213 = vadd.f32 0.0, %v212
    %v214 = vpop.f32.mrf.mxu0
    %v215 = vadd.f32 0.0, %v214
    %216 = vdwg.mxu0
    %217 = vmatpush.bf16.msra.mxu0 0
    %218 = vmatpush.bf16.msra.mxu0 0
    %219 = vmatpush.bf16.msra.mxu0 0
    %220 = vmatpush.bf16.msra.mxu0 %v196
    %221 = vmatpush.bf16.msra.mxu0 %v173
    %222 = vmatpush.bf16.msra.mxu0 %v171
    %223 = vmatpush.bf16.msra.mxu0 %v169
    %224 = vmatpush.bf16.msra.mxu0 %v167
    %225 = vmatmul.bf16.gmra.mxu0 %v186
    %v226 = vpop.f32.mrf.mxu0
    %v227 = vadd.f32 0.0, %v226
    %v228 = vpop.f32.mrf.mxu0
    %v229 = vadd.f32 0.0, %v228
    %230 = vmatmul.bf16.gmra.mxu0 %v189
    %v231 = vpop.f32.mrf.mxu0
    %v232 = vadd.f32 0.0, %v231
    %v233 = vpop.f32.mrf.mxu0
    %v234 = vadd.f32 0.0, %v233
    %235 = vdwg.mxu0
    %v240 = vunpack.c.l.b16 %v57
    %v241 = vunpack.c.l.b16 %v58
    %v242 = vunpack.c.l.b16 %v59
    %v243 = vunpack.c.l.b16 %v60
    %v244 = vpack.c.b16 %v241, %v240
    %v245 = vpack.c.b16 %v243, %v242
    %v255 = vunpack.c.l.b16 %v61
    %v256 = vunpack.c.h.b16 %v61
    %v257 = vunpack.c.l.b16 %v62
    %v258 = vunpack.c.h.b16 %v62
    %v259 = vunpack.c.l.b16 %v63
    %v260 = vunpack.c.h.b16 %v63
    %v261 = vunpack.c.l.b16 %v64
    %v262 = vunpack.c.h.b16 %v64
    %v263 = vunpack.c.l.b16 %v65
    %v264 = vunpack.c.h.b16 %v65
    %v265 = vunpack.c.l.b16 %v66
    %v266 = vunpack.c.h.b16 %v66
    %v267 = vunpack.c.l.b16 %v67
    %v268 = vunpack.c.h.b16 %v67
    %v269 = vunpack.c.l.b16 %v68
    %v270 = vunpack.c.h.b16 %v68
    %v271 = vunpack.c.l.b16 %v69
    %v272 = vunpack.c.h.b16 %v69
    %v273 = vpack.c.b16 %v257, %v255
    %v274 = vpack.c.b16 %v258, %v256
    %v275 = vpack.c.b16 %v261, %v259
    %v276 = vpack.c.b16 %v262, %v260
    %v277 = vpack.c.b16 %v265, %v263
    %v278 = vpack.c.b16 %v266, %v264
    %v279 = vpack.c.b16 %v269, %v267
    %v280 = vpack.c.b16 %v270, %v268
    %v281 = vpack.c.b16 %v271, %v271
    %v282 = vpack.c.b16 %v272, %v272
    %v292 = vsel %vm184, %v244, 0
    %v295 = vsel %vm184, %v245, 0
    %v298 = vsel %vm191, %v281, 0
    %v301 = vsel %vm191, %v282, 0
    %303 = vmatpush.bf16.msra.mxu0 0
    %304 = vmatpush.bf16.msra.mxu0 0
    %305 = vmatpush.bf16.msra.mxu0 0
    %306 = vmatpush.bf16.msra.mxu0 %v298
    %307 = vmatpush.bf16.msra.mxu0 %v279
    %308 = vmatpush.bf16.msra.mxu0 %v277
    %309 = vmatpush.bf16.msra.mxu0 %v275
    %310 = vmatpush.bf16.msra.mxu0 %v273
    %311 = vmatmul.bf16.gmra.mxu0 %v292
    %v312 = vpop.f32.mrf.mxu0
    %v313 = vadd.f32 %v208, %v312
    %v314 = vpop.f32.mrf.mxu0
    %v315 = vadd.f32 %v210, %v314
    %316 = vmatmul.bf16.gmra.mxu0 %v295
    %v317 = vpop.f32.mrf.mxu0
    %v318 = vadd.f32 %v213, %v317
    %v319 = vpop.f32.mrf.mxu0
    %v320 = vadd.f32 %v215, %v319
    %321 = vdwg.mxu0
    %322 = vmatpush.bf16.msra.mxu0 0
    %323 = vmatpush.bf16.msra.mxu0 0
    %324 = vmatpush.bf16.msra.mxu0 0
    %325 = vmatpush.bf16.msra.mxu0 %v301
    %326 = vmatpush.bf16.msra.mxu0 %v280
    %327 = vmatpush.bf16.msra.mxu0 %v278
    %328 = vmatpush.bf16.msra.mxu0 %v276
    %329 = vmatpush.bf16.msra.mxu0 %v274
    %330 = vmatmul.bf16.gmra.mxu0 %v292
    %v331 = vpop.f32.mrf.mxu0
    %v332 = vadd.f32 %v227, %v331
    %v333 = vpop.f32.mrf.mxu0
    %v334 = vadd.f32 %v229, %v333
    %335 = vmatmul.bf16.gmra.mxu0 %v295
    %v336 = vpop.f32.mrf.mxu0
    %v337 = vadd.f32 %v232, %v336
    %v338 = vpop.f32.mrf.mxu0
    %v339 = vadd.f32 %v234, %v338
    %340 = vdwg.mxu0
    %v341 = vld [vmem:[%s0] sm:$0xe]
    %v342 = vld [vmem:[%s0 + $0xc] sm:$0xe]
    %vm347 = vcmask 1042432
    %vm348 = vcmask 1046532
    %vm349 = vmor %vm347, %vm348
    %v350 = vrot.slane %v341, 5
    %v351 = vrot.slane %v350, 4
    %v352 = vrot.slane %v58, 5
    %v353 = vsel %vm349, %v351, %v352
    %v354 = vrot.slane %v352, 4
    %v355 = vrot.slane %v70, 5
    %v356 = vsel %vm349, %v354, %v355
    %v357 = vrot.slane %v342, 5
    %v358 = vrot.slane %v357, 4
    %v359 = vrot.slane %v60, 5
    %v360 = vsel %vm349, %v358, %v359
    %v361 = vrot.slane %v359, 4
    %v362 = vrot.slane %v71, 5
    %v363 = vsel %vm349, %v361, %v362
    %s364 = scalar_lea.vmem [#allocation3], 144
    %v365 = vld [vmem:[%s364] sm:$0xff]
    %v366 = vld [vmem:[%s364 + $0x8] sm:$0xff]
    %v367 = vld [vmem:[%s364 + $0x10] sm:$0xff]
    %v368 = vld [vmem:[%s364 + $0x18] sm:$0xff]
    %v369 = vld [vmem:[%s364 + $0x20] sm:$0xff]
    %v370 = vld [vmem:[%s364 + $0x28] sm:$0xff]
    %v371 = vld [vmem:[%s364 + $0x30] sm:$0xff]
    %v372 = vld [vmem:[%s364 + $0x38] sm:$0xff]
    %v373 = vld [vmem:[%s364 + $0x40] sm:$0xff]
    %v374 = vunpack.c.l.b16 %v353
    %v375 = vunpack.c.l.b16 %v356
    %v376 = vunpack.c.l.b16 %v360
    %v377 = vunpack.c.l.b16 %v363
    %v378 = vpack.c.b16 %v375, %v374
    %v379 = vpack.c.b16 %v377, %v376
    %v389 = vunpack.c.l.b16 %v365
    %v390 = vunpack.c.h.b16 %v365
    %v391 = vunpack.c.l.b16 %v366
    %v392 = vunpack.c.h.b16 %v366
    %v393 = vunpack.c.l.b16 %v367
    %v394 = vunpack.c.h.b16 %v367
    %v395 = vunpack.c.l.b16 %v368
    %v396 = vunpack.c.h.b16 %v368
    %v397 = vunpack.c.l.b16 %v369
    %v398 = vunpack.c.h.b16 %v369
    %v399 = vunpack.c.l.b16 %v370
    %v400 = vunpack.c.h.b16 %v370
    %v401 = vunpack.c.l.b16 %v371
    %v402 = vunpack.c.h.b16 %v371
    %v403 = vunpack.c.l.b16 %v372
    %v404 = vunpack.c.h.b16 %v372
    %v405 = vunpack.c.l.b16 %v373
    %v406 = vunpack.c.h.b16 %v373
    %v407 = vpack.c.b16 %v391, %v389
    %v408 = vpack.c.b16 %v392, %v390
    %v409 = vpack.c.b16 %v395, %v393
    %v410 = vpack.c.b16 %v396, %v394
    %v411 = vpack.c.b16 %v399, %v397
    %v412 = vpack.c.b16 %v400, %v398
    %v413 = vpack.c.b16 %v403, %v401
    %v414 = vpack.c.b16 %v404, %v402
    %v415 = vpack.c.b16 %v405, %v405
    %v416 = vpack.c.b16 %v406, %v406
    %v426 = vsel %vm184, %v378, 0
    %v429 = vsel %vm184, %v379, 0
    %v432 = vsel %vm191, %v415, 0
    %v435 = vsel %vm191, %v416, 0
    %437 = vmatpush.bf16.msra.mxu0 0
    %438 = vmatpush.bf16.msra.mxu0 0
    %439 = vmatpush.bf16.msra.mxu0 0
    %440 = vmatpush.bf16.msra.mxu0 %v432
    %441 = vmatpush.bf16.msra.mxu0 %v413
    %442 = vmatpush.bf16.msra.mxu0 %v411
    %443 = vmatpush.bf16.msra.mxu0 %v409
    %444 = vmatpush.bf16.msra.mxu0 %v407
    %445 = vmatmul.bf16.gmra.mxu0 %v426
    %v446 = vpop.f32.mrf.mxu0
    %v447 = vadd.f32 0.0, %v446
    %v448 = vpop.f32.mrf.mxu0
    %v449 = vadd.f32 0.0, %v448
    %450 = vmatmul.bf16.gmra.mxu0 %v429
    %v451 = vpop.f32.mrf.mxu0
    %v452 = vadd.f32 0.0, %v451
    %v453 = vpop.f32.mrf.mxu0
    %v454 = vadd.f32 0.0, %v453
    %455 = vdwg.mxu0
    %456 = vmatpush.bf16.msra.mxu0 0
    %457 = vmatpush.bf16.msra.mxu0 0
    %458 = vmatpush.bf16.msra.mxu0 0
    %459 = vmatpush.bf16.msra.mxu0 %v435
    %460 = vmatpush.bf16.msra.mxu0 %v414
    %461 = vmatpush.bf16.msra.mxu0 %v412
    %462 = vmatpush.bf16.msra.mxu0 %v410
    %463 = vmatpush.bf16.msra.mxu0 %v408
    %464 = vmatmul.bf16.gmra.mxu0 %v426
    %v465 = vpop.f32.mrf.mxu0
    %v466 = vadd.f32 0.0, %v465
    %v467 = vpop.f32.mrf.mxu0
    %v468 = vadd.f32 0.0, %v467
    %469 = vmatmul.bf16.gmra.mxu0 %v429
    %v470 = vpop.f32.mrf.mxu0
    %v471 = vadd.f32 0.0, %v470
    %v472 = vpop.f32.mrf.mxu0
    %v473 = vadd.f32 0.0, %v472
    %474 = vdwg.mxu0
    %v475 = vadd.f32 %v313, %v447
    %v476 = vadd.f32 %v332, %v466
    %v477 = vadd.f32 %v315, %v449
    %v478 = vadd.f32 %v334, %v468
    %v479 = vadd.f32 %v318, %v452
    %v480 = vadd.f32 %v337, %v471
    %v481 = vadd.f32 %v320, %v454
    %v482 = vadd.f32 %v339, %v473
    %483 = vst [vmem:[#allocation2] sm:$0xff] %v475
    %484 = vst [vmem:[#allocation2 + $0x8] sm:$0xff] %v476
    %485 = vst [vmem:[#allocation2 + $0x10] sm:$0xff] %v477
    %486 = vst [vmem:[#allocation2 + $0x18] sm:$0xff] %v478
    %487 = vst [vmem:[#allocation2 + $0x20] sm:$0xff] %v479
    %488 = vst [vmem:[#allocation2 + $0x28] sm:$0xff] %v480
    %489 = vst [vmem:[#allocation2 + $0x30] sm:$0xff] %v481
    %490 = vst [vmem:[#allocation2 + $0x38] sm:$0xff] %v482
    %v491 = vld [vmem:[#allocation2] sm:$0xff]
    %v492 = vld [vmem:[#allocation2 + $0x8] sm:$0xff]
    %v493 = vld [vmem:[#allocation2 + $0x10] sm:$0xff]
    %v494 = vld [vmem:[#allocation2 + $0x18] sm:$0xff]
    %v495 = vld [vmem:[#allocation2 + $0x20] sm:$0xff]
    %v496 = vld [vmem:[#allocation2 + $0x28] sm:$0xff]
    %v497 = vld [vmem:[#allocation2 + $0x30] sm:$0xff]
    %v498 = vld [vmem:[#allocation2 + $0x38] sm:$0xff]
    %v499 = vld [vmem:[%s2] sm:$0x3]
    %v500 = vadd.f32 %v491, %v493
    %v501 = vrot.slane %v500, 4
    %v502 = vadd.f32 %v500, %v501
    %v503 = vrot.slane %v502, 2
    %v504 = vadd.f32 %v502, %v503
    %v505 = vrot.slane %v504, 1
    %v506 = vadd.f32 %v504, %v505
    %v507 = vadd.f32 %v492, %v494
    %v508 = vrot.slane %v507, 4
    %v509 = vadd.f32 %v507, %v508
    %v510 = vrot.slane %v509, 2
    %v511 = vadd.f32 %v509, %v510
    %v512 = vrot.slane %v511, 1
    %v513 = vadd.f32 %v511, %v512
    %v514 = vadd.f32 %v495, %v497
    %v515 = vrot.slane %v514, 4
    %v516 = vadd.f32 %v514, %v515
    %v517 = vrot.slane %v516, 2
    %v518 = vadd.f32 %v516, %v517
    %v519 = vrot.slane %v518, 1
    %v520 = vadd.f32 %v518, %v519
    %v521 = vadd.f32 %v496, %v498
    %v522 = vrot.slane %v521, 4
    %v523 = vadd.f32 %v521, %v522
    %v524 = vrot.slane %v523, 2
    %v525 = vadd.f32 %v523, %v524
    %v526 = vrot.slane %v525, 1
    %v527 = vadd.f32 %v525, %v526
    %v528 = vmul.f32 %v491, %v491
    %v529 = vmul.f32 %v492, %v492
    %v530 = vmul.f32 %v493, %v493
    %v531 = vmul.f32 %v494, %v494
    %v532 = vmul.f32 %v495, %v495
    %v533 = vmul.f32 %v496, %v496
    %v534 = vmul.f32 %v497, %v497
    %v535 = vmul.f32 %v498, %v498
    %v536 = vadd.f32 %v528, %v530
    %v537 = vrot.slane %v536, 4
    %v538 = vadd.f32 %v536, %v537
    %v539 = vrot.slane %v538, 2
    %v540 = vadd.f32 %v538, %v539
    %v541 = vrot.slane %v540, 1
    %v542 = vadd.f32 %v540, %v541
    %v543 = vadd.f32 %v529, %v531
    %v544 = vrot.slane %v543, 4
    %v545 = vadd.f32 %v543, %v544
    %v546 = vrot.slane %v545, 2
    %v547 = vadd.f32 %v545, %v546
    %v548 = vrot.slane %v547, 1
    %v549 = vadd.f32 %v547, %v548
    %v550 = vadd.f32 %v532, %v534
    %v551 = vrot.slane %v550, 4
    %v552 = vadd.f32 %v550, %v551
    %v553 = vrot.slane %v552, 2
    %v554 = vadd.f32 %v552, %v553
    %v555 = vrot.slane %v554, 1
    %v556 = vadd.f32 %v554, %v555
    %v557 = vadd.f32 %v533, %v535
    %v558 = vrot.slane %v557, 4
    %v559 = vadd.f32 %v557, %v558
    %v560 = vrot.slane %v559, 2
    %v561 = vadd.f32 %v559, %v560
    %v562 = vrot.slane %v561, 1
    %v563 = vadd.f32 %v561, %v562
    %v564 = vmul.f32 %v499, 16.0
    %v566 = vperm.slane %v564, 0
    %v567 = vperm.slane %v564, 1
    %v570 = vadd.f32 %v506, %v566
    %v571 = vadd.f32 %v513, %v567
    %v572 = vadd.f32 %v520, %v566
    %v573 = vadd.f32 %v527, %v567
    %v574 = vmul.f32 %v499, 2.0
    %v576 = vperm.slane %v574, 0
    %v577 = vperm.slane %v574, 1
    %vm584 = vcmask 1041409
    %v585 = vsel %vm584, %v520, %v506
    %v586 = vsel %vm584, %v527, %v513
    %v589 = vmul.f32 %v576, %v585
    %v590 = vmul.f32 %v577, %v586
    %v593 = vrot.slane %v589, 1
    %v594 = vrot.slane %v590, 1
    %v599 = vadd.f32 %v542, %v589
    %v600 = vadd.f32 %v549, %v590
    %v601 = vadd.f32 %v556, %v593
    %v602 = vadd.f32 %v563, %v594
    %v603 = vmul.f32 %v564, %v499
    %v605 = vperm.slane %v603, 0
    %v606 = vperm.slane %v603, 1
    %v609 = vadd.f32 %v599, %v605
    %v610 = vadd.f32 %v600, %v606
    %v611 = vadd.f32 %v601, %v605
    %v612 = vadd.f32 %v602, %v606
    %v617 = vrot.slane %v572, 7
    %v618 = vsel %vm584, %v617, %v570
    %v619 = vrot.slane %v573, 7
    %v620 = vsel %vm584, %v619, %v571
    %v627 = vrot.slane %v609, 6
    %v628 = vrot.slane %v611, 5
    %vm629 = vcmask 1043459
    %v630 = vsel %vm629, %v628, %v627
    %v631 = vrot.slane %v610, 6
    %v632 = vrot.slane %v612, 5
    %v633 = vsel %vm629, %v632, %v631
    %vm636 = vcmask 1041408
    %v637 = vsel %vm636, %v618, %v630
    %v638 = vsel %vm636, %v620, %v633
    %v639 = vld [vmem:[#allocation6] sm:$0xff]
    %v640 = vld [vmem:[#allocation6 + $0x8] sm:$0xff]
    %v641 = vld [vmem:[#allocation6 + $0x10] sm:$0xff]
    %v642 = vld [vmem:[#allocation6 + $0x18] sm:$0xff]
    %v643 = vld [vmem:[#allocation6 + $0x20] sm:$0xff]
    %v644 = vld [vmem:[#allocation6 + $0x28] sm:$0xff]
    %v645 = vld [vmem:[#allocation6 + $0x30] sm:$0xff]
    %v646 = vld [vmem:[#allocation6 + $0x38] sm:$0xff]
    %v647 = vld [vmem:[#allocation6 + $0x40] sm:$0xff]
    %v648 = vld [vmem:[#allocation6 + $0x48] sm:$0xff]
    %v649 = vld [vmem:[#allocation6 + $0x50] sm:$0xff]
    %v650 = vld [vmem:[#allocation6 + $0x58] sm:$0xff]
    %v651 = vld [vmem:[#allocation6 + $0x60] sm:$0xff]
    %v652 = vld [vmem:[#allocation6 + $0x68] sm:$0xff]
    %v653 = vld [vmem:[#allocation6 + $0x70] sm:$0xff]
    %v654 = vld [vmem:[#allocation6 + $0x78] sm:$0xff]
    %v655 = vld [vmem:[#allocation6 + $0x80] sm:$0xff]
    %v656 = vld [vmem:[#allocation6 + $0x88] sm:$0xff]
    %v657 = vld [vmem:[#allocation6 + $0x90] sm:$0xff]
    %v658 = vld [vmem:[#allocation6 + $0x98] sm:$0xff]
    %v659 = vld [vmem:[#allocation6 + $0xa0] sm:$0xff]
    %v660 = vld [vmem:[#allocation6 + $0xa8] sm:$0xff]
    %v661 = vld [vmem:[#allocation6 + $0xb0] sm:$0xff]
    %v662 = vld [vmem:[#allocation6 + $0xb8] sm:$0xff]
    %v663 = vld [vmem:[#allocation6 + $0xc0] sm:$0xff]
    %v664 = vld [vmem:[#allocation6 + $0xc8] sm:$0xff]
    %v665 = vld [vmem:[#allocation6 + $0xd0] sm:$0xff]
    %v666 = vld [vmem:[#allocation6 + $0xd8] sm:$0xff]
    %v667 = vld [vmem:[#allocation6 + $0xe0] sm:$0xff]
    %v668 = vld [vmem:[#allocation6 + $0xe8] sm:$0xff]
    %v669 = vld [vmem:[#allocation6 + $0xf0] sm:$0xff]
    %v670 = vld [vmem:[#allocation6 + $0xf8] sm:$0xff]
    %v671 = vld [vmem:[#allocation6 + $0x100] sm:$0xff]
    %v672 = vld [vmem:[#allocation6 + $0x108] sm:$0xff]
    %v673 = vld [vmem:[#allocation6 + $0x110] sm:$0xff]
    %v674 = vld [vmem:[#allocation6 + $0x118] sm:$0xff]
    %v675 = vld [vmem:[#allocation6 + $0x120] sm:$0xff]
    %v676 = vld [vmem:[#allocation6 + $0x128] sm:$0xff]
    %v677 = vld [vmem:[#allocation6 + $0x130] sm:$0xff]
    %v678 = vld [vmem:[#allocation6 + $0x138] sm:$0xff]
    %v679 = vld [vmem:[#allocation6 + $0x140] sm:$0xff]
    %v680 = vld [vmem:[#allocation6 + $0x148] sm:$0xff]
    %v681 = vld [vmem:[#allocation6 + $0x150] sm:$0xff]
    %v682 = vld [vmem:[#allocation6 + $0x158] sm:$0xff]
    %v683 = vld [vmem:[#allocation6 + $0x160] sm:$0xff]
    %v684 = vld [vmem:[#allocation6 + $0x168] sm:$0xff]
    %v685 = vld [vmem:[#allocation6 + $0x170] sm:$0xff]
    %v686 = vld [vmem:[#allocation6 + $0x178] sm:$0xff]
    %v687 = vld [vmem:[#allocation6 + $0x180] sm:$0xff]
    %v688 = vld [vmem:[#allocation6 + $0x188] sm:$0xff]
    %v689 = vld [vmem:[#allocation6 + $0x190] sm:$0xff]
    %v690 = vld [vmem:[#allocation6 + $0x198] sm:$0xff]
    %v691 = vld [vmem:[#allocation6 + $0x1a0] sm:$0xff]
    %v692 = vld [vmem:[#allocation6 + $0x1a8] sm:$0xff]
    %v693 = vld [vmem:[#allocation6 + $0x1b0] sm:$0xff]
    %v694 = vld [vmem:[#allocation6 + $0x1b8] sm:$0xff]
    %v695 = vld [vmem:[#allocation6 + $0x1c0] sm:$0xff]
    %v696 = vld [vmem:[#allocation6 + $0x1c8] sm:$0xff]
    %v697 = vld [vmem:[#allocation6 + $0x1d0] sm:$0xff]
    %v698 = vld [vmem:[#allocation6 + $0x1d8] sm:$0xff]
    %v699 = vld [vmem:[#allocation6 + $0x1e0] sm:$0xff]
    %v700 = vld [vmem:[#allocation6 + $0x1e8] sm:$0xff]
    %v701 = vld [vmem:[#allocation6 + $0x1f0] sm:$0xff]
    %v702 = vld [vmem:[#allocation6 + $0x1f8] sm:$0xff]
    %703 = vmatpush.msra.mxu0 %v669
    %704 = vmatpush.msra.mxu0 %v667
    %705 = vmatpush.msra.mxu0 %v665
    %706 = vmatpush.msra.mxu0 %v663
    %707 = vmatpush.msra.mxu0 %v661
    %708 = vmatpush.msra.mxu0 %v659
    %709 = vmatpush.msra.mxu0 %v657
    %710 = vmatpush.msra.mxu0 %v655
    %711 = vmatpush.msra.mxu0 %v653
    %712 = vmatpush.msra.mxu0 %v651
    %713 = vmatpush.msra.mxu0 %v649
    %714 = vmatpush.msra.mxu0 %v647
    %715 = vmatpush.msra.mxu0 %v645
    %716 = vmatpush.msra.mxu0 %v643
    %717 = vmatpush.msra.mxu0 %v641
    %718 = vmatpush.msra.mxu0 %v639
    %719 = vmatmul.f32.gmra.mxu0 %v637
    %v720 = vpop.f32.mrf.mxu0
    %v721 = vadd.f32 0.0, %v720
    %722 = vdwg.mxu0
    %723 = vmatpush.msra.mxu0 %v701
    %724 = vmatpush.msra.mxu0 %v699
    %725 = vmatpush.msra.mxu0 %v697
    %726 = vmatpush.msra.mxu0 %v695
    %727 = vmatpush.msra.mxu0 %v693
    %728 = vmatpush.msra.mxu0 %v691
    %729 = vmatpush.msra.mxu0 %v689
    %730 = vmatpush.msra.mxu0 %v687
    %731 = vmatpush.msra.mxu0 %v685
    %732 = vmatpush.msra.mxu0 %v683
    %733 = vmatpush.msra.mxu0 %v681
    %734 = vmatpush.msra.mxu0 %v679
    %735 = vmatpush.msra.mxu0 %v677
    %736 = vmatpush.msra.mxu0 %v675
    %737 = vmatpush.msra.mxu0 %v673
    %738 = vmatpush.msra.mxu0 %v671
    %739 = vmatmul.f32.gmra.mxu0 %v638
    %v740 = vpop.f32.mrf.mxu0
    %v741 = vadd.f32 %v721, %v740
    %742 = vdwg.mxu0
    %743 = vmatpush.msra.mxu0 %v670
    %744 = vmatpush.msra.mxu0 %v668
    %745 = vmatpush.msra.mxu0 %v666
    %746 = vmatpush.msra.mxu0 %v664
    %747 = vmatpush.msra.mxu0 %v662
    %748 = vmatpush.msra.mxu0 %v660
    %749 = vmatpush.msra.mxu0 %v658
    %750 = vmatpush.msra.mxu0 %v656
    %751 = vmatpush.msra.mxu0 %v654
    %752 = vmatpush.msra.mxu0 %v652
    %753 = vmatpush.msra.mxu0 %v650
    %754 = vmatpush.msra.mxu0 %v648
    %755 = vmatpush.msra.mxu0 %v646
    %756 = vmatpush.msra.mxu0 %v644
    %757 = vmatpush.msra.mxu0 %v642
    %758 = vmatpush.msra.mxu0 %v640
    %759 = vmatmul.f32.gmra.mxu0 %v637
    %v760 = vpop.f32.mrf.mxu0
    %v761 = vadd.f32 0.0, %v760
    %762 = vdwg.mxu0
    %763 = vmatpush.msra.mxu0 %v702
    %764 = vmatpush.msra.mxu0 %v700
    %765 = vmatpush.msra.mxu0 %v698
    %766 = vmatpush.msra.mxu0 %v696
    %767 = vmatpush.msra.mxu0 %v694
    %768 = vmatpush.msra.mxu0 %v692
    %769 = vmatpush.msra.mxu0 %v690
    %770 = vmatpush.msra.mxu0 %v688
    %771 = vmatpush.msra.mxu0 %v686
    %772 = vmatpush.msra.mxu0 %v684
    %773 = vmatpush.msra.mxu0 %v682
    %774 = vmatpush.msra.mxu0 %v680
    %775 = vmatpush.msra.mxu0 %v678
    %776 = vmatpush.msra.mxu0 %v676
    %777 = vmatpush.msra.mxu0 %v674
    %778 = vmatpush.msra.mxu0 %v672
    %779 = vmatmul.f32.gmra.mxu0 %v638
    %v780 = vpop.f32.mrf.mxu0
    %v781 = vadd.f32 %v761, %v780
    %782 = vdwg.mxu0
    %v785 = vrot.slane %v781, 7
    %vm786 = vcmask 1040384
    %v787 = vsel %vm786, %v741, %v785
    %v788 = vsel %vm584, %v741, %v785
    %v789 = vrot.slane %v788, 1
    %792 = vst [vmem:[#allocation1] sm:$0xff] %v741
    %793 = vst [vmem:[#allocation1 + $0x9] sm:$0xff] %v781
    %s794 = scalar_lea.vmem [#allocation1], 2
    %v795 = vld [vmem:[%s794] ss:$9 sm:$0xff]
    %s796 = scalar_lea.vmem [#allocation1], 3
    %v797 = vld [vmem:[%s796] ss:$9 sm:$0xff]
    %v800 = vmul.f32 %v787, %v787
    %v801 = vmul.f32 %v789, %v789
    %v802 = vsub.f32 %v795, %v800
    %v803 = vsub.f32 %v797, %v801
    %v804 = vmax.f32 %v802, 0.0
    %v805 = vmax.f32 %v803, 0.0
    %v806 = vadd.f32 %v804, 1e-05
    %v807 = vadd.f32 %v805, 1e-05
    %v808 = vrsqrt.pop %v806
    %v809 = vmul.f32 %v808, %v806
    %v810 = vmul.f32 %v809, %v808
    %v811 = vmul.f32 0.5, %v810
    %v812 = vsub.f32 1.5, %v811
    %v813 = vmul.f32 %v808, %v812
    %vm814 = vweird.f32 %v806
    %vm815 = vweird.f32 %v808
    %vm816 = vmor %vm814, %vm815
    %v817 = vsel %vm816, %v808, %v813
    %v818 = vrsqrt.pop %v807
    %v819 = vmul.f32 %v818, %v807
    %v820 = vmul.f32 %v819, %v818
    %v821 = vmul.f32 0.5, %v820
    %v822 = vsub.f32 1.5, %v821
    %v823 = vmul.f32 %v818, %v822
    %vm824 = vweird.f32 %v807
    %vm825 = vweird.f32 %v818
    %vm826 = vmor %vm824, %vm825
    %v827 = vsel %vm826, %v818, %v823
    %v828 = vld [vmem:[%s4] sm:$0x3]
    %v829 = vld [vmem:[%s4 + $0x2] sm:$0x3]
    %v830 = vmul.f32 %v817, %v828
    %v831 = vmul.f32 %v827, %v829
    %v832 = vsub.f32 %v499, %v787
    %v833 = vsub.f32 %v499, %v789
    %v834 = vmul.f32 %v832, %v830
    %v835 = vmul.f32 %v833, %v831
    %v836 = vld [vmem:[%s5] sm:$0x3]
    %v837 = vld [vmem:[%s5 + $0x2] sm:$0x3]
    %v838 = vadd.f32 %v834, %v836
    %v839 = vadd.f32 %v835, %v837
    %v842 = vperm.slane %v830, 0
    %v843 = vperm.slane %v830, 1
    %v844 = vperm.slane %v831, 0
    %v845 = vperm.slane %v831, 1
    %v850 = vmul.f32 %v491, %v842
    %v851 = vmul.f32 %v492, %v843
    %v852 = vmul.f32 %v493, %v842
    %v853 = vmul.f32 %v494, %v843
    %v854 = vmul.f32 %v495, %v844
    %v855 = vmul.f32 %v496, %v845
    %v856 = vmul.f32 %v497, %v844
    %v857 = vmul.f32 %v498, %v845
    %v860 = vperm.slane %v838, 0
    %v861 = vperm.slane %v838, 1
    %v862 = vperm.slane %v839, 0
    %v863 = vperm.slane %v839, 1
    %v868 = vadd.f32 %v850, %v860
    %v869 = vadd.f32 %v851, %v861
    %v870 = vadd.f32 %v852, %v860
    %v871 = vadd.f32 %v853, %v861
    %v872 = vadd.f32 %v854, %v862
    %v873 = vadd.f32 %v855, %v863
    %v874 = vadd.f32 %v856, %v862
    %v875 = vadd.f32 %v857, %v863
    %v876 = vxor.u32 %v868, 2147483648
    %v877 = vxor.u32 %v869, 2147483648
    %v878 = vxor.u32 %v870, 2147483648
    %v879 = vxor.u32 %v871, 2147483648
    %v880 = vxor.u32 %v872, 2147483648
    %v881 = vxor.u32 %v873, 2147483648
    %v882 = vxor.u32 %v874, 2147483648
    %v883 = vxor.u32 %v875, 2147483648
    %v884 = vmul.f32 %v876, 1.442695
    %v885 = vpow.pop %v884
    %v886 = vmul.f32 %v877, 1.442695
    %v887 = vpow.pop %v886
    %v888 = vmul.f32 %v878, 1.442695
    %v889 = vpow.pop %v888
    %v890 = vmul.f32 %v879, 1.442695
    %v891 = vpow.pop %v890
    %v892 = vmul.f32 %v880, 1.442695
    %v893 = vpow.pop %v892
    %v894 = vmul.f32 %v881, 1.442695
    %v895 = vpow.pop %v894
    %v896 = vmul.f32 %v882, 1.442695
    %v897 = vpow.pop %v896
    %v898 = vmul.f32 %v883, 1.442695
    %v899 = vpow.pop %v898
    %v900 = vadd.f32 %v885, 1.0
    %v901 = vadd.f32 %v887, 1.0
    %v902 = vadd.f32 %v889, 1.0
    %v903 = vadd.f32 %v891, 1.0
    %v904 = vadd.f32 %v893, 1.0
    %v905 = vadd.f32 %v895, 1.0
    %v906 = vadd.f32 %v897, 1.0
    %v907 = vadd.f32 %v899, 1.0
    %v908 = vrcp.pop %v900
    %v909 = vmul.f32 %v900, %v908
    %v910 = vsub.f32 1.0, %v909
    %v911 = vmul.f32 %v908, %v910
    %v912 = vadd.f32 %v908, %v911
    %vm913 = vweird.f32 %v900
    %vm914 = vweird.f32 %v908
    %vm915 = vmor %vm913, %vm914
    %v916 = vsel %vm915, %v908, %v912
    %v917 = vand.u32 2147483647, %v900
    %vm918 = vcmp.eq.f32.partialorder %v917, 8.507059e+37
    %v919 = vand.u32 %v900, 2147483648
    %v920 = vor.u32 1.1754944e-38, %v919
    %v921 = vsel %vm918, %v920, %v916
    %v922 = vmul.f32 1.0, %v921
    %v923 = vrcp.pop %v901
    %v924 = vmul.f32 %v901, %v923
    %v925 = vsub.f32 1.0, %v924
    %v926 = vmul.f32 %v923, %v925
    %v927 = vadd.f32 %v923, %v926
    %vm928 = vweird.f32 %v901
    %vm929 = vweird.f32 %v923
    %vm930 = vmor %vm928, %vm929
    %v931 = vsel %vm930, %v923, %v927
    %v932 = vand.u32 2147483647, %v901
    %vm933 = vcmp.eq.f32.partialorder %v932, 8.507059e+37
    %v934 = vand.u32 %v901, 2147483648
    %v935 = vor.u32 1.1754944e-38, %v934
    %v936 = vsel %vm933, %v935, %v931
    %v937 = vmul.f32 1.0, %v936
    %v938 = vrcp.pop %v902
    %v939 = vmul.f32 %v902, %v938
    %v940 = vsub.f32 1.0, %v939
    %v941 = vmul.f32 %v938, %v940
    %v942 = vadd.f32 %v938, %v941
    %vm943 = vweird.f32 %v902
    %vm944 = vweird.f32 %v938
    %vm945 = vmor %vm943, %vm944
    %v946 = vsel %vm945, %v938, %v942
    %v947 = vand.u32 2147483647, %v902
    %vm948 = vcmp.eq.f32.partialorder %v947, 8.507059e+37
    %v949 = vand.u32 %v902, 2147483648
    %v950 = vor.u32 1.1754944e-38, %v949
    %v951 = vsel %vm948, %v950, %v946
    %v952 = vmul.f32 1.0, %v951
    %v953 = vrcp.pop %v903
    %v954 = vmul.f32 %v903, %v953
    %v955 = vsub.f32 1.0, %v954
    %v956 = vmul.f32 %v953, %v955
    %v957 = vadd.f32 %v953, %v956
    %vm958 = vweird.f32 %v903
    %vm959 = vweird.f32 %v953
    %vm960 = vmor %vm958, %vm959
    %v961 = vsel %vm960, %v953, %v957
    %v962 = vand.u32 2147483647, %v903
    %vm963 = vcmp.eq.f32.partialorder %v962, 8.507059e+37
    %v964 = vand.u32 %v903, 2147483648
    %v965 = vor.u32 1.1754944e-38, %v964
    %v966 = vsel %vm963, %v965, %v961
    %v967 = vmul.f32 1.0, %v966
    %v968 = vrcp.pop %v904
    %v969 = vmul.f32 %v904, %v968
    %v970 = vsub.f32 1.0, %v969
    %v971 = vmul.f32 %v968, %v970
    %v972 = vadd.f32 %v968, %v971
    %vm973 = vweird.f32 %v904
    %vm974 = vweird.f32 %v968
    %vm975 = vmor %vm973, %vm974
    %v976 = vsel %vm975, %v968, %v972
    %v977 = vand.u32 2147483647, %v904
    %vm978 = vcmp.eq.f32.partialorder %v977, 8.507059e+37
    %v979 = vand.u32 %v904, 2147483648
    %v980 = vor.u32 1.1754944e-38, %v979
    %v981 = vsel %vm978, %v980, %v976
    %v982 = vmul.f32 1.0, %v981
    %v983 = vrcp.pop %v905
    %v984 = vmul.f32 %v905, %v983
    %v985 = vsub.f32 1.0, %v984
    %v986 = vmul.f32 %v983, %v985
    %v987 = vadd.f32 %v983, %v986
    %vm988 = vweird.f32 %v905
    %vm989 = vweird.f32 %v983
    %vm990 = vmor %vm988, %vm989
    %v991 = vsel %vm990, %v983, %v987
    %v992 = vand.u32 2147483647, %v905
    %vm993 = vcmp.eq.f32.partialorder %v992, 8.507059e+37
    %v994 = vand.u32 %v905, 2147483648
    %v995 = vor.u32 1.1754944e-38, %v994
    %v996 = vsel %vm993, %v995, %v991
    %v997 = vmul.f32 1.0, %v996
    %v998 = vrcp.pop %v906
    %v999 = vmul.f32 %v906, %v998
    %v1000 = vsub.f32 1.0, %v999
    %v1001 = vmul.f32 %v998, %v1000
    %v1002 = vadd.f32 %v998, %v1001
    %vm1003 = vweird.f32 %v906
    %vm1004 = vweird.f32 %v998
    %vm1005 = vmor %vm1003, %vm1004
    %v1006 = vsel %vm1005, %v998, %v1002
    %v1007 = vand.u32 2147483647, %v906
    %vm1008 = vcmp.eq.f32.partialorder %v1007, 8.507059e+37
    %v1009 = vand.u32 %v906, 2147483648
    %v1010 = vor.u32 1.1754944e-38, %v1009
    %v1011 = vsel %vm1008, %v1010, %v1006
    %v1012 = vmul.f32 1.0, %v1011
    %v1013 = vrcp.pop %v907
    %v1014 = vmul.f32 %v907, %v1013
    %v1015 = vsub.f32 1.0, %v1014
    %v1016 = vmul.f32 %v1013, %v1015
    %v1017 = vadd.f32 %v1013, %v1016
    %vm1018 = vweird.f32 %v907
    %vm1019 = vweird.f32 %v1013
    %vm1020 = vmor %vm1018, %vm1019
    %v1021 = vsel %vm1020, %v1013, %v1017
    %v1022 = vand.u32 2147483647, %v907
    %vm1023 = vcmp.eq.f32.partialorder %v1022, 8.507059e+37
    %v1024 = vand.u32 %v907, 2147483648
    %v1025 = vor.u32 1.1754944e-38, %v1024
    %v1026 = vsel %vm1023, %v1025, %v1021
    %v1027 = vmul.f32 1.0, %v1026
    %v1028 = vmul.f32 %v868, %v922
    %v1029 = vmul.f32 %v869, %v937
    %v1030 = vmul.f32 %v870, %v952
    %v1031 = vmul.f32 %v871, %v967
    %v1032 = vmul.f32 %v872, %v982
    %v1033 = vmul.f32 %v873, %v997
    %v1034 = vmul.f32 %v874, %v1012
    %v1035 = vmul.f32 %v875, %v1027
    %v1036 = vpack.c.bf16 %v1029, %v1028
    %v1037 = vpack.c.bf16 %v1031, %v1030
    %v1038 = vpack.c.bf16 %v1033, %v1032
    %v1039 = vpack.c.bf16 %v1035, %v1034
    %1040 = vst [vmem:[#allocation8] sm:$0xff] %v1036
    %1041 = vst [vmem:[#allocation8 + $0x8] sm:$0xff] %v1037
    %1042 = vst [vmem:[#allocation8 + $0x10] sm:$0xff] %v1038
    %1043 = vst [vmem:[#allocation8 + $0x18] sm:$0xff] %v1039
    // Predicated region
    $region34: #{tpu_custom_call.1} parent=1 // pred_check
      _
    $region35: #{tpu_custom_call.1} parent=1 // pred_check_branch
      %1045 = sbr.rel (0) target = $region37
    $region36: #{tpu_custom_call.1} parent=1 // pred_region
      %1047 = vsyncadd [#allocation5], 0
      %s1048 = sshll.u32 [#allocation8], 4
      %s1049 = int_to_ptr.vmem [resolvable:$true] %s1048
      %s1050 = sshll.u32 %s6, 4
      %s1051 = int_to_ptr.hbm [resolvable:$true] %s1050
      %1056 = dma.vmem_to_hbm [thread:$0]  %s1049, 512, %s1051, [#allocation5], 128, 128, 8
    $region37: #{tpu_custom_call.1} parent=1 // pred_fallthru
      _
    // Predicated region
    $region38: #{tpu_custom_call.1} parent=1 // pred_check
      _
    $region39: #{tpu_custom_call.1} parent=1 // pred_check_branch
      %1058 = sbr.rel (0) target = $region41
    $region40: #{tpu_custom_call.1} parent=1 // pred_region
      %1060 = dma.done [#allocation5], 512
    $region41: #{tpu_custom_call.1} parent=1 // pred_fallthru
      _
    %1061 = vsyncpa [#allocation4], 1
    %1062 = vsyncpa [#allocation7], 1
    %1063 = vsyncpa [#allocation5], 1

</llo_original>
